<compile_context>
chip_gen: v7x
topology: tpu7x:2x2x1
jax: 0.10.0
libtpu: 0.0.40
codegen_flags: <defaults>
</compile_context>

<pallas_src>
import functools

import jax
import jax.numpy as jnp
from jax import lax
from jax.experimental import pallas as pl
from jax.experimental.pallas import tpu as pltpu

KERNEL_SIZE = 5
PADDING = 1
LANE = 128
SUBLANE = 8


def _round_up(x, m):
    return (x + m - 1) // m * m


# --------------------------------------------------------------------------
# Kernel
# --------------------------------------------------------------------------
def cnn_kernel(x_ref, w_ref, b_ref, o_ref):
    """x_ref: (TN, e_char, m_word) f32 (native layout)
       w_ref: (KC_pad, E_pad) bf16      b_ref: (1, E_pad) f32
       o_ref: (TN, E_pad) f32"""
    tn, e_char, m_word = x_ref.shape
    kc_pad, e_pad = w_ref.shape
    kc = KERNEL_SIZE * e_char
    l_out = m_word + 2 * PADDING - KERNEL_SIZE + 1
    l_out_pad = _round_up(l_out, SUBLANE)
    t_total = l_out_pad + KERNEL_SIZE - 1

    # Conv zero-padding (+ l_out padding) along the native lane (time) axis.
    x = x_ref[...]                                          # (TN, e_char, m_word)
    lead = jnp.zeros((tn, e_char, PADDING), x.dtype)
    trail = jnp.zeros((tn, e_char, t_total - PADDING - m_word), x.dtype)
    x_p = jnp.concatenate([lead, x, trail], axis=-1)        # (TN, e_char, T_total)

    # In-VMEM relayout: time -> sublanes, channels -> lanes (no extra HBM pass).
    xt = jnp.transpose(x_p, (0, 2, 1))                      # (TN, T_total, e_char) f32

    # im2col slab: K time-shifted slices + zero lanes up to KC_pad so the
    # contraction dim is lane-dense and an exact multiple of 128.
    parts = [xt[:, k:k + l_out_pad, :] for k in range(KERNEL_SIZE)]
    if kc_pad > kc:
        parts.append(jnp.zeros((tn, l_out_pad, kc_pad - kc), xt.dtype))
    slab = (jnp.concatenate(parts, axis=-1)                 # (TN, l_out_pad, KC_pad)
            .reshape(tn * l_out_pad, kc_pad)                # 8-aligned f32 fold
            .astype(jnp.bfloat16))

    # Single flattened MXU matmul: M = TN*l_out_pad, K = KC_pad, N = E_pad.
    acc = jnp.dot(slab, w_ref[...], preferred_element_type=jnp.float32)
    acc3 = acc.reshape(tn, l_out_pad, e_pad)

    # Max over the valid time rows only (padded rows excluded, == -inf mask);
    # bias + ReLU deferred past the max (bias const over t, ReLU monotone).
    m = jnp.max(acc3[:, :l_out, :], axis=1)                 # (TN, E_pad)
    o_ref[...] = jnp.maximum(m + b_ref[...], 0.0).astype(o_ref.dtype)


# --------------------------------------------------------------------------
# Chip-aware sizing
# --------------------------------------------------------------------------
def _chip_budget():
    """Returns (vmem_limit_bytes to request, tile-sizing budget,
    #TensorCores that share the ('parallel',) grid)."""
    phys = 128 << 20
    try:
        phys = int(pltpu.get_tpu_info().vmem_capacity_bytes)
    except Exception:
        pass
    kind = ""
    try:
        kind = jax.devices()[0].device_kind.lower()
    except Exception:
        pass
    # Chips whose TensorCores are sharded over a "parallel" Pallas grid axis.
    n_cores = 2 if any(t in kind for t in ("v4", "v5p", "7")) else 1
    # e.g. v5e/v6e (128 MiB physical) -> 96 MiB limit; v7x (64 MiB) -> 48 MiB.
    limit = max(32 << 20, min(int(phys * 0.75), phys - (16 << 20)))
    budget = int(limit * 0.85)
    return limit, budget, n_cores


def _vmem_bytes(tile_n, e_char, m_word, l_out_pad, kc_pad, e_pad):
    """Conservative VMEM model *including* Mosaic (sublane, lane) tile padding."""
    f32, bf16 = 4, 2
    lane = lambda d: _round_up(d, LANE)
    sub = lambda d: _round_up(d, SUBLANE)
    t_total = l_out_pad + KERNEL_SIZE - 1
    # Pallas double-buffers every pipelined HBM<->VMEM block.
    x_blk = 2 * tile_n * sub(e_char) * lane(m_word) * f32
    w_blk = 2 * sub(kc_pad) * lane(e_pad) * bf16
    b_blk = 2 * SUBLANE * lane(e_pad) * f32
    o_blk = 2 * sub(tile_n) * lane(e_pad) * f32
    # In-kernel temporaries (flat-summed -> conservative; ignores buffer reuse).
    x_pad = tile_n * sub(e_char) * lane(t_total) * f32       # time-padded x
    xt = tile_n * sub(t_total) * lane(e_char) * f32          # transposed x
    slab = tile_n * l_out_pad * kc_pad * (f32 + bf16)        # f32 slab + bf16 cast
    acc = tile_n * l_out_pad * lane(e_pad) * f32             # flattened matmul acc
    return x_blk + w_blk + b_blk + o_blk + x_pad + xt + slab + acc


def _pick_tile_n(n, e_char, m_word, l_out_pad, kc_pad, e_pad,
                 budget, n_cores, max_tile=1024):
    """Rows per grid step: as big as the (padding-aware) VMEM budget allows,
    no pointless halving on single-TC chips, even step count on 2-TC chips."""
    fixed = _vmem_bytes(0, e_char, m_word, l_out_pad, kc_pad, e_pad)
    per_row = (_vmem_bytes(SUBLANE, e_char, m_word, l_out_pad, kc_pad, e_pad)
               - fixed) // SUBLANE
    cap = (budget - fixed) // max(per_row, 1)
    cap = max(SUBLANE, cap // SUBLANE * SUBLANE)
    tile = min(max_tile, cap, _round_up(n, SUBLANE))
    tile = max(SUBLANE, tile // SUBLANE * SUBLANE)
    if n_cores == 2 and n > SUBLANE:
        steps = pl.cdiv(n, tile)
        if steps % 2 == 1:
            tile = max(SUBLANE, _round_up(pl.cdiv(n, steps + 1), SUBLANE))
    return tile


# --------------------------------------------------------------------------
# Forward wrapper
# --------------------------------------------------------------------------
@functools.partial(jax.jit, static_argnames=("tile_n",))
def cnn_forward(x, weight, bias, *, tile_n=None):
    """x: (N, e_char, m_word) f32   weight: (e_word, e_char, K)   bias: (e_word,)
       returns: (N, e_word) float32 -- matches the PyTorch CNN.forward output."""
    n, e_char, m_word = x.shape
    e_word = weight.shape[0]
    l_out = m_word + 2 * PADDING - KERNEL_SIZE + 1
    assert l_out >= 1, "m_word too small for kernel_size=5, padding=1"
    l_out_pad = _round_up(l_out, SUBLANE)
    kc = KERNEL_SIZE * e_char
    kc_pad = _round_up(kc, LANE)
    e_pad = _round_up(e_word, LANE)

    vmem_limit, budget, n_cores = _chip_budget()
    if tile_n is None:
        tile_n = _pick_tile_n(n, e_char, m_word, l_out_pad, kc_pad, e_pad,
                              budget, n_cores)
    tile_n = _round_up(int(tile_n), SUBLANE)
    steps = pl.cdiv(n, tile_n)
    n_out = steps * tile_n                       # partial last block: OOB x rows
    #                                              only feed output rows >= n,
    #                                              which are sliced off below.

    # Tiny parameter-side prep (weights/bias only; x goes in untouched).
    w_k = jnp.transpose(weight, (2, 1, 0)).reshape(kc, e_word)
    w_k = jnp.pad(w_k, ((0, kc_pad - kc), (0, e_pad - e_word))).astype(jnp.bfloat16)
    b_k = jnp.pad(bias, (0, e_pad - e_word)).reshape(1, e_pad).astype(jnp.float32)

    flops = 2 * n_out * l_out_pad * kc_pad * e_pad
    bytes_accessed = (x.size * x.dtype.itemsize + w_k.size * 2 + b_k.size * 4
                      + n_out * e_pad * 4)

    out = pl.pallas_call(
        cnn_kernel,
        out_shape=jax.ShapeDtypeStruct((n_out, e_pad), jnp.float32),
        grid_spec=pltpu.PrefetchScalarGridSpec(
            num_scalar_prefetch=0,
            grid=(steps,),
            in_specs=[
                pl.BlockSpec((tile_n, e_char, m_word), lambda i: (i, 0, 0)),
                pl.BlockSpec((kc_pad, e_pad), lambda i: (0, 0)),
                pl.BlockSpec((1, e_pad), lambda i: (0, 0)),
            ],
            out_specs=pl.BlockSpec((tile_n, e_pad), lambda i: (i, 0)),
        ),
        compiler_params=pltpu.CompilerParams(
            dimension_semantics=("parallel",),
            vmem_limit_bytes=vmem_limit),
        cost_estimate=pl.CostEstimate(
            flops=flops, transcendentals=0, bytes_accessed=bytes_accessed),
    )(x, w_k, b_k)
    return out[:n, :e_word]


def cnn_reference(x_nchw, weight, bias):
    """Pure-JAX f32 reference replicating nn.Conv1d + ReLU + AdaptiveMaxPool1d(1)."""
    conv = lax.conv_general_dilated(
        x_nchw, weight,
        window_strides=(1,), padding=[(PADDING, PADDING)],
        dimension_numbers=("NCH", "OIH", "NCH"),
    ) + bias[None, :, None]
    relu = jnp.maximum(conv, 0.0)
    return jnp.max(relu, axis=-1)


if __name__ == "__main__":
    # small shapes implied by the module: (src_len * batch, e_char, m_word)
    src_len, batch = 4, 2
    e_char, e_word, m_word = 8, 32, 16
    n = src_len * batch                                       # 8

    key = jax.random.PRNGKey(0)
    kx, kw, kb = jax.random.split(key, 3)
    x = jax.random.normal(kx, (n, e_char, m_word), dtype=jnp.float32)
    # PyTorch Conv1d parameter shapes: weight (out, in, K), bias (out,)
    weight = 0.1 * jax.random.normal(kw, (e_word, e_char, KERNEL_SIZE), jnp.float32)
    bias = 0.1 * jax.random.normal(kb, (e_word,), jnp.float32)

    out = jax.block_until_ready(cnn_forward(x, weight, bias))
    ref = cnn_reference(x, weight, bias)

    assert out.shape == (n, e_word)
    # bf16 MXU inputs (f32 accumulation) -> loosened tolerance vs f32 reference.
    assert jnp.allclose(out, ref, atol=5e-2, rtol=5e-2), "mismatch vs reference"
    print("KERNEL_OK")
</pallas_src>

<mosaic_0001>
module attributes {stable_mosaic.version = 11 : i64} {
  func.func @cnn_kernel(%arg0: i32, %arg1: memref<8x8x16xf32, #tpu.memory_space<vmem>>, %arg2: memref<128x128xbf16, #tpu.memory_space<vmem>>, %arg3: memref<1x128xf32, #tpu.memory_space<vmem>>, %arg4: memref<8x128xf32, #tpu.memory_space<vmem>>) attributes {dimension_semantics = [#tpu.dimension_semantics<parallel>], iteration_bounds = array<i64: 1>, scalar_prefetch = 0 : i64, scratch_operands = 0 : i64, tpu.core_type = #tpu.core_type<tc>, window_params = [{transform_indices = @transform_0, window_bounds = array<i64: 8, 8, 16>}, {pipeline_mode = #tpu.pipeline_mode<synchronous>, transform_indices = @transform_1, window_bounds = array<i64: 128, 128>}, {pipeline_mode = #tpu.pipeline_mode<synchronous>, transform_indices = @transform_2, window_bounds = array<i64: 1, 128>}, {transform_indices = @transform_3, window_bounds = array<i64: 8, 128>}]} {
    %c0 = arith.constant 0 : index
    %c0_0 = arith.constant 0 : index
    %c0_1 = arith.constant 0 : index
    %0 = vector.load %arg1[%c0, %c0_0, %c0_1] : memref<8x8x16xf32, #tpu.memory_space<vmem>>, vector<8x8x16xf32>
    %cst = arith.constant 0.000000e+00 : f32
    %1 = vector.broadcast %cst : f32 to vector<8x8x1xf32>
    %cst_2 = arith.constant 0.000000e+00 : f32
    %2 = vector.broadcast %cst_2 : f32 to vector<8x8x3xf32>
    %3 = tpu.concatenate %1, %0, %2 in 2 : vector<8x8x1xf32>, vector<8x8x16xf32>, vector<8x8x3xf32> -> vector<8x8x20xf32>
    %4 = tpu.transpose %3, [0, 2, 1] : vector<8x8x20xf32> -> vector<8x20x8xf32>
    %5 = vector.extract_strided_slice %4 {offsets = [0, 0, 0], sizes = [8, 16, 8], strides = [1, 1, 1]} : vector<8x20x8xf32> to vector<8x16x8xf32>
    %6 = vector.extract_strided_slice %4 {offsets = [0, 1, 0], sizes = [8, 16, 8], strides = [1, 1, 1]} : vector<8x20x8xf32> to vector<8x16x8xf32>
    %7 = vector.extract_strided_slice %4 {offsets = [0, 2, 0], sizes = [8, 16, 8], strides = [1, 1, 1]} : vector<8x20x8xf32> to vector<8x16x8xf32>
    %8 = vector.extract_strided_slice %4 {offsets = [0, 3, 0], sizes = [8, 16, 8], strides = [1, 1, 1]} : vector<8x20x8xf32> to vector<8x16x8xf32>
    %9 = vector.extract_strided_slice %4 {offsets = [0, 4, 0], sizes = [8, 16, 8], strides = [1, 1, 1]} : vector<8x20x8xf32> to vector<8x16x8xf32>
    %cst_3 = arith.constant 0.000000e+00 : f32
    %10 = vector.broadcast %cst_3 : f32 to vector<8x16x88xf32>
    %11 = tpu.concatenate %5, %6, %7, %8, %9, %10 in 2 : vector<8x16x8xf32>, vector<8x16x8xf32>, vector<8x16x8xf32>, vector<8x16x8xf32>, vector<8x16x8xf32>, vector<8x16x88xf32> -> vector<8x16x128xf32>
    %12 = vector.shape_cast %11 : vector<8x16x128xf32> to vector<128x128xf32>
    %13 = arith.truncf %12 : vector<128x128xf32> to vector<128x128xbf16>
    %c0_4 = arith.constant 0 : index
    %c0_5 = arith.constant 0 : index
    %14 = vector.load %arg2[%c0_4, %c0_5] : memref<128x128xbf16, #tpu.memory_space<vmem>>, vector<128x128xbf16>
    %cst_6 = arith.constant dense<0.000000e+00> : vector<128x128xf32>
    %15 = tpu.matmul %13, %14, %cst_6 {dimension_numbers = #tpu.dot_dimension_numbers<[1], [0], [0], [1], [0, 0, 1, 1], [], []>} : vector<128x128xbf16>, vector<128x128xbf16>, vector<128x128xf32> -> vector<128x128xf32>
    %16 = vector.shape_cast %15 : vector<128x128xf32> to vector<8x16x128xf32>
    %17 = vector.extract_strided_slice %16 {offsets = [0, 0, 0], sizes = [8, 14, 128], strides = [1, 1, 1]} : vector<8x16x128xf32> to vector<8x14x128xf32>
    %cst_7 = arith.constant dense<0xFF800000> : vector<8x128xf32>
    %18 = vector.multi_reduction <maximumf>, %17, %cst_7 [1] : vector<8x14x128xf32> to vector<8x128xf32>
    %c0_8 = arith.constant 0 : index
    %c0_9 = arith.constant 0 : index
    %19 = vector.load %arg3[%c0_8, %c0_9] : memref<1x128xf32, #tpu.memory_space<vmem>>, vector<1x128xf32>
    %20 = vector.broadcast %19 : vector<1x128xf32> to vector<8x128xf32>
    %21 = arith.addf %18, %20 : vector<8x128xf32>
    %cst_10 = arith.constant 0.000000e+00 : f32
    %22 = vector.broadcast %cst_10 : f32 to vector<8x128xf32>
    %23 = arith.maximumf %21, %22 : vector<8x128xf32>
    %c0_11 = arith.constant 0 : index
    %c0_12 = arith.constant 0 : index
    %24 = vector.load %arg4[%c0_11, %c0_12] : memref<8x128xf32, #tpu.memory_space<vmem>>, vector<8x128xf32>
    tpu.vector_store %arg4[%c0_11, %c0_12], %23 {strides = array<i32>} : memref<8x128xf32, #tpu.memory_space<vmem>>, vector<8x128xf32>,
    return
  }
  func.func @transform_0(%arg0: i32) -> (i32, i32, i32) {
    %c0_i32 = arith.constant 0 : i32
    %c0_i32_0 = arith.constant 0 : i32
    %c0_i32_1 = arith.constant 0 : i32
    return %arg0, %c0_i32, %c0_i32_0 : i32, i32, i32
  }
  func.func @transform_1(%arg0: i32) -> (i32, i32) {
    %c0_i32 = arith.constant 0 : i32
    %c0_i32_0 = arith.constant 0 : i32
    %c0_i32_1 = arith.constant 0 : i32
    return %c0_i32, %c0_i32_0 : i32, i32
  }
  func.func @transform_2(%arg0: i32) -> (i32, i32) {
    %c0_i32 = arith.constant 0 : i32
    %c0_i32_0 = arith.constant 0 : i32
    %c0_i32_1 = arith.constant 0 : i32
    return %c0_i32, %c0_i32_0 : i32, i32
  }
  func.func @transform_3(%arg0: i32) -> (i32, i32) {
    %c0_i32 = arith.constant 0 : i32
    %c0_i32_0 = arith.constant 0 : i32
    return %arg0, %c0_i32 : i32, i32
  }
}

</mosaic_0001>

<llo_original>
// kernel: cnn_forward.1
$region0: #{cnn_forward.1}
  #allocation0 [shape = 'u32[]', space=smem, size = 0x4, offset = 0x4, fixed_abs, tag = 'smem constant byte address 0x4 - core index']
  #allocation1 [shape = 'u32[144,128]{1,0:T(1,128)}', space=vmem, size = 0x12000, scoped, tag = 'internal scratch']
  %s0 = inlined_call_operand.hbm [shape: f32[8,8,16], index: 0, kind: input, shape index: {}]
  %s1 = inlined_call_operand.hbm [shape: bf16[128,128], index: 1, kind: input, shape index: {}]
  %s2 = inlined_call_operand.hbm [shape: f32[1,128], index: 2, kind: input, shape index: {}]
  %s3 = inlined_call_operand.hbm [shape: f32[8,128], index: 3, kind: output, shape index: {}]
  %s4 = sld [smem:[#allocation0]]
  $region34: #{cnn_forward.1} parent=0
    _
  %s6 = ssub.s32 1, %s4
  %s7 = scalar_select 0, %s6, %s4
  $region1: #{cnn_forward.1} parent=0
    #allocation2 [shape = 'u8[32768]{0}', space=vmem, size = 0x8000, scoped, tag = 'input window, operand 0, single buffered']
    #allocation3 [shape = 's32[1]{0}', space=sflag, size = 0x4, scoped, tag = 'scoped memory for cnn_forward.1']
    #allocation4 [shape = 's32[1]{0}', space=sflag, size = 0x4, scoped, tag = 'scoped memory for cnn_forward.1']
    #allocation5 [shape = 'u8[32768]{0}', space=vmem, size = 0x8000, scoped, tag = 'input window, operand 1, single buffered']
    #allocation6 [shape = 's32[1]{0}', space=sflag, size = 0x4, scoped, tag = 'scoped memory for cnn_forward.1']
    #allocation7 [shape = 'u8[512]{0}', space=vmem, size = 0x400, scoped, tag = 'input window, operand 2, single buffered']
    #allocation8 [shape = 'u8[4096]{0}', space=vmem, size = 0x1000, scoped, tag = 'output window, operand 0, single buffered']
    %8 = vsyncpa [#allocation3], 0
    %9 = vsyncpa [#allocation6], 0
    %10 = vsyncpa [#allocation4], 0
    // Predicated region
    $region2: #{cnn_forward.1} parent=1 // pred_check
      _
    $region3: #{cnn_forward.1} parent=1 // pred_check_branch
      %12 = sbr.rel (0) target = $region5
    $region4: #{cnn_forward.1} parent=1 // pred_region
      %s14 = ssub.s32 1024, 1024
      %15 = vsyncadd [#allocation3], %s14
      %s16 = sshll.u32 [#allocation2], 4
      %s17 = int_to_ptr.vmem [resolvable:$true] %s16
      %22 = dma.hbm_to_vmem [thread:$0]  %s0, 1024, %s17, [#allocation3], 128, 128, 8
    $region5: #{cnn_forward.1} parent=1 // pred_fallthru
      _
    // Predicated region
    $region6: #{cnn_forward.1} parent=1 // pred_check
      _
    $region7: #{cnn_forward.1} parent=1 // pred_check_branch
      %24 = sbr.rel (0) target = $region9
    $region8: #{cnn_forward.1} parent=1 // pred_region
      %s26 = ssub.s32 1024, 1024
      %27 = vsyncadd [#allocation6], %s26
      %s28 = sshll.u32 [#allocation5], 4
      %s29 = int_to_ptr.vmem [resolvable:$true] %s28
      %34 = dma.hbm_to_vmem [thread:$0]  %s1, 1024, %s29, [#allocation6], 64, 64, 4
    $region9: #{cnn_forward.1} parent=1 // pred_fallthru
      _
    // Predicated region
    $region10: #{cnn_forward.1} parent=1 // pred_check
      _
    $region11: #{cnn_forward.1} parent=1 // pred_check_branch
      %36 = sbr.rel (0) target = $region13
    $region12: #{cnn_forward.1} parent=1 // pred_region
      %s38 = ssub.s32 16, 16
      %39 = vsyncadd [#allocation6], %s38
      %s41 = sshll.u32 [#allocation7], 4
      %s42 = int_to_ptr.vmem [resolvable:$true] %s41
      %44 = dma.hbm_to_vmem [thread:$0]  %s2, 16, %s42, [#allocation6]
    $region13: #{cnn_forward.1} parent=1 // pred_fallthru
      _
    // Predicated region
    $region14: #{cnn_forward.1} parent=1 // pred_check
      _
    $region15: #{cnn_forward.1} parent=1 // pred_check_branch
      %46 = sbr.rel (0) target = $region17
    $region16: #{cnn_forward.1} parent=1 // pred_region
      %47 = dma.done [#allocation3], 1024
    $region17: #{cnn_forward.1} parent=1 // pred_fallthru
      _
    // Predicated region
    $region18: #{cnn_forward.1} parent=1 // pred_check
      _
    $region19: #{cnn_forward.1} parent=1 // pred_check_branch
      %49 = sbr.rel (0) target = $region21
    $region20: #{cnn_forward.1} parent=1 // pred_region
      %50 = dma.done [#allocation6], 1024
    $region21: #{cnn_forward.1} parent=1 // pred_fallthru
      _
    // Predicated region
    $region22: #{cnn_forward.1} parent=1 // pred_check
      _
    $region23: #{cnn_forward.1} parent=1 // pred_check_branch
      %52 = sbr.rel (0) target = $region25
    $region24: #{cnn_forward.1} parent=1 // pred_region
      %53 = dma.done [#allocation6], 16
    $region25: #{cnn_forward.1} parent=1 // pred_fallthru
      _
    %v55 = vld [vmem:[#allocation2] sm:$0xff]
    %v56 = vld [vmem:[#allocation2 + $0x8] sm:$0xff]
    %v57 = vld [vmem:[#allocation2 + $0x10] sm:$0xff]
    %v58 = vld [vmem:[#allocation2 + $0x18] sm:$0xff]
    %v59 = vld [vmem:[#allocation2 + $0x20] sm:$0xff]
    %v60 = vld [vmem:[#allocation2 + $0x28] sm:$0xff]
    %v61 = vld [vmem:[#allocation2 + $0x30] sm:$0xff]
    %v62 = vld [vmem:[#allocation2 + $0x38] sm:$0xff]
    %71 = vrot.lane.b32.xlu0 %v55, 1
    %v72 = vpop.permute.xlu0 %71
    %73 = vrot.lane.b32.xlu0 %v56, 1
    %v74 = vpop.permute.xlu0 %73
    %75 = vrot.lane.b32.xlu0 %v57, 1
    %v76 = vpop.permute.xlu0 %75
    %77 = vrot.lane.b32.xlu0 %v58, 1
    %v78 = vpop.permute.xlu0 %77
    %79 = vrot.lane.b32.xlu0 %v59, 1
    %v80 = vpop.permute.xlu0 %79
    %81 = vrot.lane.b32.xlu0 %v60, 1
    %v82 = vpop.permute.xlu0 %81
    %83 = vrot.lane.b32.xlu0 %v61, 1
    %v84 = vpop.permute.xlu0 %83
    %85 = vrot.lane.b32.xlu0 %v62, 1
    %v86 = vpop.permute.xlu0 %85
    %vm95 = vcmask 7168
    %v96 = vsel %vm95, 0.0, %v72
    %v97 = vsel %vm95, 0.0, %v74
    %v98 = vsel %vm95, 0.0, %v76
    %v99 = vsel %vm95, 0.0, %v78
    %v100 = vsel %vm95, 0.0, %v80
    %v101 = vsel %vm95, 0.0, %v82
    %v102 = vsel %vm95, 0.0, %v84
    %v103 = vsel %vm95, 0.0, %v86
    %vm104 = vcmask 138240
    %v105 = vsel %vm104, %v96, 0.0
    %v106 = vsel %vm104, %v97, 0.0
    %v107 = vsel %vm104, %v98, 0.0
    %v108 = vsel %vm104, %v99, 0.0
    %v109 = vsel %vm104, %v100, 0.0
    %v110 = vsel %vm104, %v101, 0.0
    %v111 = vsel %vm104, %v102, 0.0
    %v112 = vsel %vm104, %v103, 0.0
    %113 = vxpose.xlu0.b32.start [1/16] %v105, 128
    %114 = vxpose.xlu0.b32.cont [2/16] 0.0, 128
    %115 = vxpose.xlu0.b32.cont [3/16] 0.0, 128
    %116 = vxpose.xlu0.b32.cont [4/16] 0.0, 128
    %117 = vxpose.xlu0.b32.cont [5/16] 0.0, 128
    %118 = vxpose.xlu0.b32.cont [6/16] 0.0, 128
    %119 = vxpose.xlu0.b32.cont [7/16] 0.0, 128
    %120 = vxpose.xlu0.b32.cont [8/16] 0.0, 128
    %121 = vxpose.xlu0.b32.cont [9/16] 0.0, 128
    %122 = vxpose.xlu0.b32.cont [10/16] 0.0, 128
    %123 = vxpose.xlu0.b32.cont [11/16] 0.0, 128
    %124 = vxpose.xlu0.b32.cont [12/16] 0.0, 128
    %125 = vxpose.xlu0.b32.cont [13/16] 0.0, 128
    %126 = vxpose.xlu0.b32.cont [14/16] 0.0, 128
    %127 = vxpose.xlu0.b32.cont [15/16] 0.0, 128
    %128 = vxpose.xlu0.b32.end [16/16] 0.0, 128
    %v129 = vpop.trf.xlu0
    %v130 = vpop.trf.xlu0
    %v131 = vpop.trf.xlu0
    %v132 = vpop.trf.xlu0
    %v133 = vpop.trf.xlu0
    %v134 = vpop.trf.xlu0
    %v135 = vpop.trf.xlu0
    %v136 = vpop.trf.xlu0
    %v137 = vpop.trf.xlu0
    %v138 = vpop.trf.xlu0
    %v139 = vpop.trf.xlu0
    %v140 = vpop.trf.xlu0
    %v141 = vpop.trf.xlu0
    %v142 = vpop.trf.xlu0
    %v143 = vpop.trf.xlu0
    %v144 = vpop.trf.xlu0
    %145 = vxpose.xlu0.b32.start [1/16] %v106, 128
    %146 = vxpose.xlu0.b32.cont [2/16] 0.0, 128
    %147 = vxpose.xlu0.b32.cont [3/16] 0.0, 128
    %148 = vxpose.xlu0.b32.cont [4/16] 0.0, 128
    %149 = vxpose.xlu0.b32.cont [5/16] 0.0, 128
    %150 = vxpose.xlu0.b32.cont [6/16] 0.0, 128
    %151 = vxpose.xlu0.b32.cont [7/16] 0.0, 128
    %152 = vxpose.xlu0.b32.cont [8/16] 0.0, 128
    %153 = vxpose.xlu0.b32.cont [9/16] 0.0, 128
    %154 = vxpose.xlu0.b32.cont [10/16] 0.0, 128
    %155 = vxpose.xlu0.b32.cont [11/16] 0.0, 128
    %156 = vxpose.xlu0.b32.cont [12/16] 0.0, 128
    %157 = vxpose.xlu0.b32.cont [13/16] 0.0, 128
    %158 = vxpose.xlu0.b32.cont [14/16] 0.0, 128
    %159 = vxpose.xlu0.b32.cont [15/16] 0.0, 128
    %160 = vxpose.xlu0.b32.end [16/16] 0.0, 128
    %v161 = vpop.trf.xlu0
    %v162 = vpop.trf.xlu0
    %v163 = vpop.trf.xlu0
    %v164 = vpop.trf.xlu0
    %v165 = vpop.trf.xlu0
    %v166 = vpop.trf.xlu0
    %v167 = vpop.trf.xlu0
    %v168 = vpop.trf.xlu0
    %v169 = vpop.trf.xlu0
    %v170 = vpop.trf.xlu0
    %v171 = vpop.trf.xlu0
    %v172 = vpop.trf.xlu0
    %v173 = vpop.trf.xlu0
    %v174 = vpop.trf.xlu0
    %v175 = vpop.trf.xlu0
    %v176 = vpop.trf.xlu0
    %177 = vxpose.xlu0.b32.start [1/16] %v107, 128
    %178 = vxpose.xlu0.b32.cont [2/16] 0.0, 128
    %179 = vxpose.xlu0.b32.cont [3/16] 0.0, 128
    %180 = vxpose.xlu0.b32.cont [4/16] 0.0, 128
    %181 = vxpose.xlu0.b32.cont [5/16] 0.0, 128
    %182 = vxpose.xlu0.b32.cont [6/16] 0.0, 128
    %183 = vxpose.xlu0.b32.cont [7/16] 0.0, 128
    %184 = vxpose.xlu0.b32.cont [8/16] 0.0, 128
    %185 = vxpose.xlu0.b32.cont [9/16] 0.0, 128
    %186 = vxpose.xlu0.b32.cont [10/16] 0.0, 128
    %187 = vxpose.xlu0.b32.cont [11/16] 0.0, 128
    %188 = vxpose.xlu0.b32.cont [12/16] 0.0, 128
    %189 = vxpose.xlu0.b32.cont [13/16] 0.0, 128
    %190 = vxpose.xlu0.b32.cont [14/16] 0.0, 128
    %191 = vxpose.xlu0.b32.cont [15/16] 0.0, 128
    %192 = vxpose.xlu0.b32.end [16/16] 0.0, 128
    %v193 = vpop.trf.xlu0
    %v194 = vpop.trf.xlu0
    %v195 = vpop.trf.xlu0
    %v196 = vpop.trf.xlu0
    %v197 = vpop.trf.xlu0
    %v198 = vpop.trf.xlu0
    %v199 = vpop.trf.xlu0
    %v200 = vpop.trf.xlu0
    %v201 = vpop.trf.xlu0
    %v202 = vpop.trf.xlu0
    %v203 = vpop.trf.xlu0
    %v204 = vpop.trf.xlu0
    %v205 = vpop.trf.xlu0
    %v206 = vpop.trf.xlu0
    %v207 = vpop.trf.xlu0
    %v208 = vpop.trf.xlu0
    %209 = vxpose.xlu0.b32.start [1/16] %v108, 128
    %210 = vxpose.xlu0.b32.cont [2/16] 0.0, 128
    %211 = vxpose.xlu0.b32.cont [3/16] 0.0, 128
    %212 = vxpose.xlu0.b32.cont [4/16] 0.0, 128
    %213 = vxpose.xlu0.b32.cont [5/16] 0.0, 128
    %214 = vxpose.xlu0.b32.cont [6/16] 0.0, 128
    %215 = vxpose.xlu0.b32.cont [7/16] 0.0, 128
    %216 = vxpose.xlu0.b32.cont [8/16] 0.0, 128
    %217 = vxpose.xlu0.b32.cont [9/16] 0.0, 128
    %218 = vxpose.xlu0.b32.cont [10/16] 0.0, 128
    %219 = vxpose.xlu0.b32.cont [11/16] 0.0, 128
    %220 = vxpose.xlu0.b32.cont [12/16] 0.0, 128
    %221 = vxpose.xlu0.b32.cont [13/16] 0.0, 128
    %222 = vxpose.xlu0.b32.cont [14/16] 0.0, 128
    %223 = vxpose.xlu0.b32.cont [15/16] 0.0, 128
    %224 = vxpose.xlu0.b32.end [16/16] 0.0, 128
    %v225 = vpop.trf.xlu0
    %v226 = vpop.trf.xlu0
    %v227 = vpop.trf.xlu0
    %v228 = vpop.trf.xlu0
    %v229 = vpop.trf.xlu0
    %v230 = vpop.trf.xlu0
    %v231 = vpop.trf.xlu0
    %v232 = vpop.trf.xlu0
    %v233 = vpop.trf.xlu0
    %v234 = vpop.trf.xlu0
    %v235 = vpop.trf.xlu0
    %v236 = vpop.trf.xlu0
    %v237 = vpop.trf.xlu0
    %v238 = vpop.trf.xlu0
    %v239 = vpop.trf.xlu0
    %v240 = vpop.trf.xlu0
    %241 = vxpose.xlu0.b32.start [1/16] %v109, 128
    %242 = vxpose.xlu0.b32.cont [2/16] 0.0, 128
    %243 = vxpose.xlu0.b32.cont [3/16] 0.0, 128
    %244 = vxpose.xlu0.b32.cont [4/16] 0.0, 128
    %245 = vxpose.xlu0.b32.cont [5/16] 0.0, 128
    %246 = vxpose.xlu0.b32.cont [6/16] 0.0, 128
    %247 = vxpose.xlu0.b32.cont [7/16] 0.0, 128
    %248 = vxpose.xlu0.b32.cont [8/16] 0.0, 128
    %249 = vxpose.xlu0.b32.cont [9/16] 0.0, 128
    %250 = vxpose.xlu0.b32.cont [10/16] 0.0, 128
    %251 = vxpose.xlu0.b32.cont [11/16] 0.0, 128
    %252 = vxpose.xlu0.b32.cont [12/16] 0.0, 128
    %253 = vxpose.xlu0.b32.cont [13/16] 0.0, 128
    %254 = vxpose.xlu0.b32.cont [14/16] 0.0, 128
    %255 = vxpose.xlu0.b32.cont [15/16] 0.0, 128
    %256 = vxpose.xlu0.b32.end [16/16] 0.0, 128
    %v257 = vpop.trf.xlu0
    %v258 = vpop.trf.xlu0
    %v259 = vpop.trf.xlu0
    %v260 = vpop.trf.xlu0
    %v261 = vpop.trf.xlu0
    %v262 = vpop.trf.xlu0
    %v263 = vpop.trf.xlu0
    %v264 = vpop.trf.xlu0
    %v265 = vpop.trf.xlu0
    %v266 = vpop.trf.xlu0
    %v267 = vpop.trf.xlu0
    %v268 = vpop.trf.xlu0
    %v269 = vpop.trf.xlu0
    %v270 = vpop.trf.xlu0
    %v271 = vpop.trf.xlu0
    %v272 = vpop.trf.xlu0
    %273 = vxpose.xlu0.b32.start [1/16] %v110, 128
    %274 = vxpose.xlu0.b32.cont [2/16] 0.0, 128
    %275 = vxpose.xlu0.b32.cont [3/16] 0.0, 128
    %276 = vxpose.xlu0.b32.cont [4/16] 0.0, 128
    %277 = vxpose.xlu0.b32.cont [5/16] 0.0, 128
    %278 = vxpose.xlu0.b32.cont [6/16] 0.0, 128
    %279 = vxpose.xlu0.b32.cont [7/16] 0.0, 128
    %280 = vxpose.xlu0.b32.cont [8/16] 0.0, 128
    %281 = vxpose.xlu0.b32.cont [9/16] 0.0, 128
    %282 = vxpose.xlu0.b32.cont [10/16] 0.0, 128
    %283 = vxpose.xlu0.b32.cont [11/16] 0.0, 128
    %284 = vxpose.xlu0.b32.cont [12/16] 0.0, 128
    %285 = vxpose.xlu0.b32.cont [13/16] 0.0, 128
    %286 = vxpose.xlu0.b32.cont [14/16] 0.0, 128
    %287 = vxpose.xlu0.b32.cont [15/16] 0.0, 128
    %288 = vxpose.xlu0.b32.end [16/16] 0.0, 128
    %v289 = vpop.trf.xlu0
    %v290 = vpop.trf.xlu0
    %v291 = vpop.trf.xlu0
    %v292 = vpop.trf.xlu0
    %v293 = vpop.trf.xlu0
    %v294 = vpop.trf.xlu0
    %v295 = vpop.trf.xlu0
    %v296 = vpop.trf.xlu0
    %v297 = vpop.trf.xlu0
    %v298 = vpop.trf.xlu0
    %v299 = vpop.trf.xlu0
    %v300 = vpop.trf.xlu0
    %v301 = vpop.trf.xlu0
    %v302 = vpop.trf.xlu0
    %v303 = vpop.trf.xlu0
    %v304 = vpop.trf.xlu0
    %305 = vxpose.xlu0.b32.start [1/16] %v111, 128
    %306 = vxpose.xlu0.b32.cont [2/16] 0.0, 128
    %307 = vxpose.xlu0.b32.cont [3/16] 0.0, 128
    %308 = vxpose.xlu0.b32.cont [4/16] 0.0, 128
    %309 = vxpose.xlu0.b32.cont [5/16] 0.0, 128
    %310 = vxpose.xlu0.b32.cont [6/16] 0.0, 128
    %311 = vxpose.xlu0.b32.cont [7/16] 0.0, 128
    %312 = vxpose.xlu0.b32.cont [8/16] 0.0, 128
    %313 = vxpose.xlu0.b32.cont [9/16] 0.0, 128
    %314 = vxpose.xlu0.b32.cont [10/16] 0.0, 128
    %315 = vxpose.xlu0.b32.cont [11/16] 0.0, 128
    %316 = vxpose.xlu0.b32.cont [12/16] 0.0, 128
    %317 = vxpose.xlu0.b32.cont [13/16] 0.0, 128
    %318 = vxpose.xlu0.b32.cont [14/16] 0.0, 128
    %319 = vxpose.xlu0.b32.cont [15/16] 0.0, 128
    %320 = vxpose.xlu0.b32.end [16/16] 0.0, 128
    %v321 = vpop.trf.xlu0
    %v322 = vpop.trf.xlu0
    %v323 = vpop.trf.xlu0
    %v324 = vpop.trf.xlu0
    %v325 = vpop.trf.xlu0
    %v326 = vpop.trf.xlu0
    %v327 = vpop.trf.xlu0
    %v328 = vpop.trf.xlu0
    %v329 = vpop.trf.xlu0
    %v330 = vpop.trf.xlu0
    %v331 = vpop.trf.xlu0
    %v332 = vpop.trf.xlu0
    %v333 = vpop.trf.xlu0
    %v334 = vpop.trf.xlu0
    %v335 = vpop.trf.xlu0
    %v336 = vpop.trf.xlu0
    %337 = vxpose.xlu0.b32.start [1/16] %v112, 128
    %338 = vxpose.xlu0.b32.cont [2/16] 0.0, 128
    %339 = vxpose.xlu0.b32.cont [3/16] 0.0, 128
    %340 = vxpose.xlu0.b32.cont [4/16] 0.0, 128
    %341 = vxpose.xlu0.b32.cont [5/16] 0.0, 128
    %342 = vxpose.xlu0.b32.cont [6/16] 0.0, 128
    %343 = vxpose.xlu0.b32.cont [7/16] 0.0, 128
    %344 = vxpose.xlu0.b32.cont [8/16] 0.0, 128
    %345 = vxpose.xlu0.b32.cont [9/16] 0.0, 128
    %346 = vxpose.xlu0.b32.cont [10/16] 0.0, 128
    %347 = vxpose.xlu0.b32.cont [11/16] 0.0, 128
    %348 = vxpose.xlu0.b32.cont [12/16] 0.0, 128
    %349 = vxpose.xlu0.b32.cont [13/16] 0.0, 128
    %350 = vxpose.xlu0.b32.cont [14/16] 0.0, 128
    %351 = vxpose.xlu0.b32.cont [15/16] 0.0, 128
    %352 = vxpose.xlu0.b32.end [16/16] 0.0, 128
    %v353 = vpop.trf.xlu0
    %v354 = vpop.trf.xlu0
    %v355 = vpop.trf.xlu0
    %v356 = vpop.trf.xlu0
    %v357 = vpop.trf.xlu0
    %v358 = vpop.trf.xlu0
    %v359 = vpop.trf.xlu0
    %v360 = vpop.trf.xlu0
    %v361 = vpop.trf.xlu0
    %v362 = vpop.trf.xlu0
    %v363 = vpop.trf.xlu0
    %v364 = vpop.trf.xlu0
    %v365 = vpop.trf.xlu0
    %v366 = vpop.trf.xlu0
    %v367 = vpop.trf.xlu0
    %v368 = vpop.trf.xlu0
    %vm393 = vcmask 1046528
    %v394 = vrot.slane %v129, 1
    %v395 = vrot.slane %v130, 1
    %v396 = vsel %vm393, %v394, %v395
    %v397 = vrot.slane %v131, 1
    %v398 = vsel %vm393, %v395, %v397
    %v399 = vrot.slane %v161, 1
    %v400 = vrot.slane %v162, 1
    %v401 = vsel %vm393, %v399, %v400
    %v402 = vrot.slane %v163, 1
    %v403 = vsel %vm393, %v400, %v402
    %v404 = vrot.slane %v193, 1
    %v405 = vrot.slane %v194, 1
    %v406 = vsel %vm393, %v404, %v405
    %v407 = vrot.slane %v195, 1
    %v408 = vsel %vm393, %v405, %v407
    %v409 = vrot.slane %v225, 1
    %v410 = vrot.slane %v226, 1
    %v411 = vsel %vm393, %v409, %v410
    %v412 = vrot.slane %v227, 1
    %v413 = vsel %vm393, %v410, %v412
    %v414 = vrot.slane %v257, 1
    %v415 = vrot.slane %v258, 1
    %v416 = vsel %vm393, %v414, %v415
    %v417 = vrot.slane %v259, 1
    %v418 = vsel %vm393, %v415, %v417
    %v419 = vrot.slane %v289, 1
    %v420 = vrot.slane %v290, 1
    %v421 = vsel %vm393, %v419, %v420
    %v422 = vrot.slane %v291, 1
    %v423 = vsel %vm393, %v420, %v422
    %v424 = vrot.slane %v321, 1
    %v425 = vrot.slane %v322, 1
    %v426 = vsel %vm393, %v424, %v425
    %v427 = vrot.slane %v323, 1
    %v428 = vsel %vm393, %v425, %v427
    %v429 = vrot.slane %v353, 1
    %v430 = vrot.slane %v354, 1
    %v431 = vsel %vm393, %v429, %v430
    %v432 = vrot.slane %v355, 1
    %v433 = vsel %vm393, %v430, %v432
    %434 = vrot.lane.b32.xlu0 %v396, 8
    %v435 = vpop.permute.xlu0 %434
    %436 = vrot.lane.b32.xlu0 %v398, 8
    %v437 = vpop.permute.xlu0 %436
    %438 = vrot.lane.b32.xlu0 %v401, 8
    %v439 = vpop.permute.xlu0 %438
    %440 = vrot.lane.b32.xlu0 %v403, 8
    %v441 = vpop.permute.xlu0 %440
    %442 = vrot.lane.b32.xlu0 %v406, 8
    %v443 = vpop.permute.xlu0 %442
    %444 = vrot.lane.b32.xlu0 %v408, 8
    %v445 = vpop.permute.xlu0 %444
    %446 = vrot.lane.b32.xlu0 %v411, 8
    %v447 = vpop.permute.xlu0 %446
    %448 = vrot.lane.b32.xlu0 %v413, 8
    %v449 = vpop.permute.xlu0 %448
    %450 = vrot.lane.b32.xlu0 %v416, 8
    %v451 = vpop.permute.xlu0 %450
    %452 = vrot.lane.b32.xlu0 %v418, 8
    %v453 = vpop.permute.xlu0 %452
    %454 = vrot.lane.b32.xlu0 %v421, 8
    %v455 = vpop.permute.xlu0 %454
    %456 = vrot.lane.b32.xlu0 %v423, 8
    %v457 = vpop.permute.xlu0 %456
    %458 = vrot.lane.b32.xlu0 %v426, 8
    %v459 = vpop.permute.xlu0 %458
    %460 = vrot.lane.b32.xlu0 %v428, 8
    %v461 = vpop.permute.xlu0 %460
    %462 = vrot.lane.b32.xlu0 %v431, 8
    %v463 = vpop.permute.xlu0 %462
    %464 = vrot.lane.b32.xlu0 %v433, 8
    %v465 = vpop.permute.xlu0 %464
    %vm482 = vcmask 1045504
    %v483 = vrot.slane %v129, 2
    %v484 = vrot.slane %v130, 2
    %v485 = vsel %vm482, %v483, %v484
    %v486 = vrot.slane %v131, 2
    %v487 = vsel %vm482, %v484, %v486
    %v488 = vrot.slane %v161, 2
    %v489 = vrot.slane %v162, 2
    %v490 = vsel %vm482, %v488, %v489
    %v491 = vrot.slane %v163, 2
    %v492 = vsel %vm482, %v489, %v491
    %v493 = vrot.slane %v193, 2
    %v494 = vrot.slane %v194, 2
    %v495 = vsel %vm482, %v493, %v494
    %v496 = vrot.slane %v195, 2
    %v497 = vsel %vm482, %v494, %v496
    %v498 = vrot.slane %v225, 2
    %v499 = vrot.slane %v226, 2
    %v500 = vsel %vm482, %v498, %v499
    %v501 = vrot.slane %v227, 2
    %v502 = vsel %vm482, %v499, %v501
    %v503 = vrot.slane %v257, 2
    %v504 = vrot.slane %v258, 2
    %v505 = vsel %vm482, %v503, %v504
    %v506 = vrot.slane %v259, 2
    %v507 = vsel %vm482, %v504, %v506
    %v508 = vrot.slane %v289, 2
    %v509 = vrot.slane %v290, 2
    %v510 = vsel %vm482, %v508, %v509
    %v511 = vrot.slane %v291, 2
    %v512 = vsel %vm482, %v509, %v511
    %v513 = vrot.slane %v321, 2
    %v514 = vrot.slane %v322, 2
    %v515 = vsel %vm482, %v513, %v514
    %v516 = vrot.slane %v323, 2
    %v517 = vsel %vm482, %v514, %v516
    %v518 = vrot.slane %v353, 2
    %v519 = vrot.slane %v354, 2
    %v520 = vsel %vm482, %v518, %v519
    %v521 = vrot.slane %v355, 2
    %v522 = vsel %vm482, %v519, %v521
    %523 = vrot.lane.b32.xlu0 %v485, 16
    %v524 = vpop.permute.xlu0 %523
    %525 = vrot.lane.b32.xlu0 %v487, 16
    %v526 = vpop.permute.xlu0 %525
    %527 = vrot.lane.b32.xlu0 %v490, 16
    %v528 = vpop.permute.xlu0 %527
    %529 = vrot.lane.b32.xlu0 %v492, 16
    %v530 = vpop.permute.xlu0 %529
    %531 = vrot.lane.b32.xlu0 %v495, 16
    %v532 = vpop.permute.xlu0 %531
    %533 = vrot.lane.b32.xlu0 %v497, 16
    %v534 = vpop.permute.xlu0 %533
    %535 = vrot.lane.b32.xlu0 %v500, 16
    %v536 = vpop.permute.xlu0 %535
    %537 = vrot.lane.b32.xlu0 %v502, 16
    %v538 = vpop.permute.xlu0 %537
    %539 = vrot.lane.b32.xlu0 %v505, 16
    %v540 = vpop.permute.xlu0 %539
    %541 = vrot.lane.b32.xlu0 %v507, 16
    %v542 = vpop.permute.xlu0 %541
    %543 = vrot.lane.b32.xlu0 %v510, 16
    %v544 = vpop.permute.xlu0 %543
    %545 = vrot.lane.b32.xlu0 %v512, 16
    %v546 = vpop.permute.xlu0 %545
    %547 = vrot.lane.b32.xlu0 %v515, 16
    %v548 = vpop.permute.xlu0 %547
    %549 = vrot.lane.b32.xlu0 %v517, 16
    %v550 = vpop.permute.xlu0 %549
    %551 = vrot.lane.b32.xlu0 %v520, 16
    %v552 = vpop.permute.xlu0 %551
    %553 = vrot.lane.b32.xlu0 %v522, 16
    %v554 = vpop.permute.xlu0 %553
    %vm571 = vcmask 1044480
    %v572 = vrot.slane %v129, 3
    %v573 = vrot.slane %v130, 3
    %v574 = vsel %vm571, %v572, %v573
    %v575 = vrot.slane %v131, 3
    %v576 = vsel %vm571, %v573, %v575
    %v577 = vrot.slane %v161, 3
    %v578 = vrot.slane %v162, 3
    %v579 = vsel %vm571, %v577, %v578
    %v580 = vrot.slane %v163, 3
    %v581 = vsel %vm571, %v578, %v580
    %v582 = vrot.slane %v193, 3
    %v583 = vrot.slane %v194, 3
    %v584 = vsel %vm571, %v582, %v583
    %v585 = vrot.slane %v195, 3
    %v586 = vsel %vm571, %v583, %v585
    %v587 = vrot.slane %v225, 3
    %v588 = vrot.slane %v226, 3
    %v589 = vsel %vm571, %v587, %v588
    %v590 = vrot.slane %v227, 3
    %v591 = vsel %vm571, %v588, %v590
    %v592 = vrot.slane %v257, 3
    %v593 = vrot.slane %v258, 3
    %v594 = vsel %vm571, %v592, %v593
    %v595 = vrot.slane %v259, 3
    %v596 = vsel %vm571, %v593, %v595
    %v597 = vrot.slane %v289, 3
    %v598 = vrot.slane %v290, 3
    %v599 = vsel %vm571, %v597, %v598
    %v600 = vrot.slane %v291, 3
    %v601 = vsel %vm571, %v598, %v600
    %v602 = vrot.slane %v321, 3
    %v603 = vrot.slane %v322, 3
    %v604 = vsel %vm571, %v602, %v603
    %v605 = vrot.slane %v323, 3
    %v606 = vsel %vm571, %v603, %v605
    %v607 = vrot.slane %v353, 3
    %v608 = vrot.slane %v354, 3
    %v609 = vsel %vm571, %v607, %v608
    %v610 = vrot.slane %v355, 3
    %v611 = vsel %vm571, %v608, %v610
    %612 = vrot.lane.b32.xlu0 %v574, 24
    %v613 = vpop.permute.xlu0 %612
    %614 = vrot.lane.b32.xlu0 %v576, 24
    %v615 = vpop.permute.xlu0 %614
    %616 = vrot.lane.b32.xlu0 %v579, 24
    %v617 = vpop.permute.xlu0 %616
    %618 = vrot.lane.b32.xlu0 %v581, 24
    %v619 = vpop.permute.xlu0 %618
    %620 = vrot.lane.b32.xlu0 %v584, 24
    %v621 = vpop.permute.xlu0 %620
    %622 = vrot.lane.b32.xlu0 %v586, 24
    %v623 = vpop.permute.xlu0 %622
    %624 = vrot.lane.b32.xlu0 %v589, 24
    %v625 = vpop.permute.xlu0 %624
    %626 = vrot.lane.b32.xlu0 %v591, 24
    %v627 = vpop.permute.xlu0 %626
    %628 = vrot.lane.b32.xlu0 %v594, 24
    %v629 = vpop.permute.xlu0 %628
    %630 = vrot.lane.b32.xlu0 %v596, 24
    %v631 = vpop.permute.xlu0 %630
    %632 = vrot.lane.b32.xlu0 %v599, 24
    %v633 = vpop.permute.xlu0 %632
    %634 = vrot.lane.b32.xlu0 %v601, 24
    %v635 = vpop.permute.xlu0 %634
    %636 = vrot.lane.b32.xlu0 %v604, 24
    %v637 = vpop.permute.xlu0 %636
    %638 = vrot.lane.b32.xlu0 %v606, 24
    %v639 = vpop.permute.xlu0 %638
    %640 = vrot.lane.b32.xlu0 %v609, 24
    %v641 = vpop.permute.xlu0 %640
    %642 = vrot.lane.b32.xlu0 %v611, 24
    %v643 = vpop.permute.xlu0 %642
    %vm660 = vcmask 1043456
    %v661 = vrot.slane %v129, 4
    %v662 = vrot.slane %v130, 4
    %v663 = vsel %vm660, %v661, %v662
    %v664 = vrot.slane %v131, 4
    %v665 = vsel %vm660, %v662, %v664
    %v666 = vrot.slane %v161, 4
    %v667 = vrot.slane %v162, 4
    %v668 = vsel %vm660, %v666, %v667
    %v669 = vrot.slane %v163, 4
    %v670 = vsel %vm660, %v667, %v669
    %v671 = vrot.slane %v193, 4
    %v672 = vrot.slane %v194, 4
    %v673 = vsel %vm660, %v671, %v672
    %v674 = vrot.slane %v195, 4
    %v675 = vsel %vm660, %v672, %v674
    %v676 = vrot.slane %v225, 4
    %v677 = vrot.slane %v226, 4
    %v678 = vsel %vm660, %v676, %v677
    %v679 = vrot.slane %v227, 4
    %v680 = vsel %vm660, %v677, %v679
    %v681 = vrot.slane %v257, 4
    %v682 = vrot.slane %v258, 4
    %v683 = vsel %vm660, %v681, %v682
    %v684 = vrot.slane %v259, 4
    %v685 = vsel %vm660, %v682, %v684
    %v686 = vrot.slane %v289, 4
    %v687 = vrot.slane %v290, 4
    %v688 = vsel %vm660, %v686, %v687
    %v689 = vrot.slane %v291, 4
    %v690 = vsel %vm660, %v687, %v689
    %v691 = vrot.slane %v321, 4
    %v692 = vrot.slane %v322, 4
    %v693 = vsel %vm660, %v691, %v692
    %v694 = vrot.slane %v323, 4
    %v695 = vsel %vm660, %v692, %v694
    %v696 = vrot.slane %v353, 4
    %v697 = vrot.slane %v354, 4
    %v698 = vsel %vm660, %v696, %v697
    %v699 = vrot.slane %v355, 4
    %v700 = vsel %vm660, %v697, %v699
    %701 = vrot.lane.b32.xlu0 %v663, 32
    %v702 = vpop.permute.xlu0 %701
    %703 = vrot.lane.b32.xlu0 %v665, 32
    %v704 = vpop.permute.xlu0 %703
    %705 = vrot.lane.b32.xlu0 %v668, 32
    %v706 = vpop.permute.xlu0 %705
    %707 = vrot.lane.b32.xlu0 %v670, 32
    %v708 = vpop.permute.xlu0 %707
    %709 = vrot.lane.b32.xlu0 %v673, 32
    %v710 = vpop.permute.xlu0 %709
    %711 = vrot.lane.b32.xlu0 %v675, 32
    %v712 = vpop.permute.xlu0 %711
    %713 = vrot.lane.b32.xlu0 %v678, 32
    %v714 = vpop.permute.xlu0 %713
    %715 = vrot.lane.b32.xlu0 %v680, 32
    %v716 = vpop.permute.xlu0 %715
    %717 = vrot.lane.b32.xlu0 %v683, 32
    %v718 = vpop.permute.xlu0 %717
    %719 = vrot.lane.b32.xlu0 %v685, 32
    %v720 = vpop.permute.xlu0 %719
    %721 = vrot.lane.b32.xlu0 %v688, 32
    %v722 = vpop.permute.xlu0 %721
    %723 = vrot.lane.b32.xlu0 %v690, 32
    %v724 = vpop.permute.xlu0 %723
    %725 = vrot.lane.b32.xlu0 %v693, 32
    %v726 = vpop.permute.xlu0 %725
    %727 = vrot.lane.b32.xlu0 %v695, 32
    %v728 = vpop.permute.xlu0 %727
    %729 = vrot.lane.b32.xlu0 %v698, 32
    %v730 = vpop.permute.xlu0 %729
    %731 = vrot.lane.b32.xlu0 %v700, 32
    %v732 = vpop.permute.xlu0 %731
    %vm749 = vcmask 64512
    %v750 = vsel %vm749, %v129, %v435
    %v751 = vsel %vm749, %v130, %v437
    %v752 = vsel %vm749, %v161, %v439
    %v753 = vsel %vm749, %v162, %v441
    %v754 = vsel %vm749, %v193, %v443
    %v755 = vsel %vm749, %v194, %v445
    %v756 = vsel %vm749, %v225, %v447
    %v757 = vsel %vm749, %v226, %v449
    %v758 = vsel %vm749, %v257, %v451
    %v759 = vsel %vm749, %v258, %v453
    %v760 = vsel %vm749, %v289, %v455
    %v761 = vsel %vm749, %v290, %v457
    %v762 = vsel %vm749, %v321, %v459
    %v763 = vsel %vm749, %v322, %v461
    %v764 = vsel %vm749, %v353, %v463
    %v765 = vsel %vm749, %v354, %v465
    %vm766 = vcmask 130048
    %v767 = vsel %vm766, %v750, %v524
    %v768 = vsel %vm766, %v751, %v526
    %v769 = vsel %vm766, %v752, %v528
    %v770 = vsel %vm766, %v753, %v530
    %v771 = vsel %vm766, %v754, %v532
    %v772 = vsel %vm766, %v755, %v534
    %v773 = vsel %vm766, %v756, %v536
    %v774 = vsel %vm766, %v757, %v538
    %v775 = vsel %vm766, %v758, %v540
    %v776 = vsel %vm766, %v759, %v542
    %v777 = vsel %vm766, %v760, %v544
    %v778 = vsel %vm766, %v761, %v546
    %v779 = vsel %vm766, %v762, %v548
    %v780 = vsel %vm766, %v763, %v550
    %v781 = vsel %vm766, %v764, %v552
    %v782 = vsel %vm766, %v765, %v554
    %vm783 = vcmask 195584
    %v784 = vsel %vm783, %v767, %v613
    %v785 = vsel %vm783, %v768, %v615
    %v786 = vsel %vm783, %v769, %v617
    %v787 = vsel %vm783, %v770, %v619
    %v788 = vsel %vm783, %v771, %v621
    %v789 = vsel %vm783, %v772, %v623
    %v790 = vsel %vm783, %v773, %v625
    %v791 = vsel %vm783, %v774, %v627
    %v792 = vsel %vm783, %v775, %v629
    %v793 = vsel %vm783, %v776, %v631
    %v794 = vsel %vm783, %v777, %v633
    %v795 = vsel %vm783, %v778, %v635
    %v796 = vsel %vm783, %v779, %v637
    %v797 = vsel %vm783, %v780, %v639
    %v798 = vsel %vm783, %v781, %v641
    %v799 = vsel %vm783, %v782, %v643
    %vm800 = vcmask 261120
    %v801 = vsel %vm800, %v784, %v702
    %v802 = vsel %vm800, %v785, %v704
    %v803 = vsel %vm800, %v786, %v706
    %v804 = vsel %vm800, %v787, %v708
    %v805 = vsel %vm800, %v788, %v710
    %v806 = vsel %vm800, %v789, %v712
    %v807 = vsel %vm800, %v790, %v714
    %v808 = vsel %vm800, %v791, %v716
    %v809 = vsel %vm800, %v792, %v718
    %v810 = vsel %vm800, %v793, %v720
    %v811 = vsel %vm800, %v794, %v722
    %v812 = vsel %vm800, %v795, %v724
    %v813 = vsel %vm800, %v796, %v726
    %v814 = vsel %vm800, %v797, %v728
    %v815 = vsel %vm800, %v798, %v730
    %v816 = vsel %vm800, %v799, %v732
    %vm817 = vcmask 326656
    %v818 = vsel %vm817, %v801, 0.0
    %v819 = vsel %vm817, %v802, 0.0
    %v820 = vsel %vm817, %v803, 0.0
    %v821 = vsel %vm817, %v804, 0.0
    %v822 = vsel %vm817, %v805, 0.0
    %v823 = vsel %vm817, %v806, 0.0
    %v824 = vsel %vm817, %v807, 0.0
    %v825 = vsel %vm817, %v808, 0.0
    %v826 = vsel %vm817, %v809, 0.0
    %v827 = vsel %vm817, %v810, 0.0
    %v828 = vsel %vm817, %v811, 0.0
    %v829 = vsel %vm817, %v812, 0.0
    %v830 = vsel %vm817, %v813, 0.0
    %v831 = vsel %vm817, %v814, 0.0
    %v832 = vsel %vm817, %v815, 0.0
    %v833 = vsel %vm817, %v816, 0.0
    %v834 = vpack.c.bf16 %v819, %v818
    %v835 = vpack.c.bf16 %v821, %v820
    %v836 = vpack.c.bf16 %v823, %v822
    %v837 = vpack.c.bf16 %v825, %v824
    %v838 = vpack.c.bf16 %v827, %v826
    %v839 = vpack.c.bf16 %v829, %v828
    %v840 = vpack.c.bf16 %v831, %v830
    %v841 = vpack.c.bf16 %v833, %v832
    %v842 = vld [vmem:[#allocation5] sm:$0xf]
    %v843 = vld [vmem:[#allocation5 + $0x4] sm:$0xf]
    %v844 = vld [vmem:[#allocation5 + $0x8] sm:$0xf]
    %v845 = vld [vmem:[#allocation5 + $0xc] sm:$0xf]
    %v846 = vld [vmem:[#allocation5 + $0x10] sm:$0xf]
    %v847 = vld [vmem:[#allocation5 + $0x14] sm:$0xf]
    %v848 = vld [vmem:[#allocation5 + $0x18] sm:$0xf]
    %v849 = vld [vmem:[#allocation5 + $0x1c] sm:$0xf]
    %v850 = vld [vmem:[#allocation5 + $0x20] sm:$0xf]
    %v851 = vld [vmem:[#allocation5 + $0x24] sm:$0xf]
    %v852 = vld [vmem:[#allocation5 + $0x28] sm:$0xf]
    %v853 = vld [vmem:[#allocation5 + $0x2c] sm:$0xf]
    %v854 = vld [vmem:[#allocation5 + $0x30] sm:$0xf]
    %v855 = vld [vmem:[#allocation5 + $0x34] sm:$0xf]
    %v856 = vld [vmem:[#allocation5 + $0x38] sm:$0xf]
    %v857 = vld [vmem:[#allocation5 + $0x3c] sm:$0xf]
    %v874 = vunpack.c.l.b16 %v842
    %v875 = vunpack.c.l.b16 %v843
    %v876 = vunpack.c.l.b16 %v844
    %v877 = vunpack.c.l.b16 %v845
    %v878 = vunpack.c.l.b16 %v846
    %v879 = vunpack.c.l.b16 %v847
    %v880 = vunpack.c.l.b16 %v848
    %v881 = vunpack.c.l.b16 %v849
    %v882 = vunpack.c.l.b16 %v850
    %v883 = vunpack.c.l.b16 %v851
    %v884 = vunpack.c.l.b16 %v852
    %v885 = vunpack.c.l.b16 %v853
    %v886 = vunpack.c.l.b16 %v854
    %v887 = vunpack.c.l.b16 %v855
    %v888 = vunpack.c.l.b16 %v856
    %v889 = vunpack.c.l.b16 %v857
    %v890 = vpack.c.b16 %v875, %v874
    %v891 = vpack.c.b16 %v877, %v876
    %v892 = vpack.c.b16 %v879, %v878
    %v893 = vpack.c.b16 %v881, %v880
    %v894 = vpack.c.b16 %v883, %v882
    %v895 = vpack.c.b16 %v885, %v884
    %v896 = vpack.c.b16 %v887, %v886
    %v897 = vpack.c.b16 %v889, %v888
    %906 = vmatprep.subr.bf16.mxu0 0
    %907 = vmatpush1.bf16.msra.mxu0 %v890
    %908 = vmatprep.subr.bf16.mxu0 0
    %909 = vmatpush1.bf16.msra.mxu0 %v891
    %910 = vmatprep.subr.bf16.mxu0 0
    %911 = vmatpush1.bf16.msra.mxu0 %v892
    %912 = vmatprep.subr.bf16.mxu0 0
    %913 = vmatpush1.bf16.msra.mxu0 %v893
    %914 = vmatprep.subr.bf16.mxu0 0
    %915 = vmatpush1.bf16.msra.mxu0 %v894
    %916 = vmatprep.subr.bf16.mxu0 0
    %917 = vmatpush1.bf16.msra.mxu0 %v895
    %918 = vmatprep.subr.bf16.mxu0 0
    %919 = vmatpush1.bf16.msra.mxu0 %v896
    %920 = vmatprep.subr.bf16.mxu0 0
    %921 = vmatpush1.bf16.msra.mxu0 %v897
    %922 = vmatprep.subr.bf16.mxu0 0
    %923 = vmatpush1.bf16.msra.mxu0 0
    %924 = vmatprep.subr.bf16.mxu0 0
    %925 = vmatpush1.bf16.msra.mxu0 0
    %926 = vmatprep.subr.bf16.mxu0 0
    %927 = vmatpush1.bf16.msra.mxu0 0
    %928 = vmatprep.subr.bf16.mxu0 0
    %929 = vmatpush1.bf16.msra.mxu0 0
    %930 = vmatprep.subr.bf16.mxu0 0
    %931 = vmatpush1.bf16.msra.mxu0 0
    %932 = vmatprep.subr.bf16.mxu0 0
    %933 = vmatpush1.bf16.msra.mxu0 0
    %934 = vmatprep.subr.bf16.mxu0 0
    %935 = vmatpush1.bf16.msra.mxu0 0
    %936 = vmatprep.subr.bf16.mxu0 0
    %937 = vmatpush1.bf16.msra.mxu0 0
    %938 = vmatprep.mubr.bf16.mxu0 0
    %939 = vmatmul.mubr.bf16.gmra.mrb[0].mxu0 %v834
    %v940 = vpop.f32.mrb[0].mxu0
    %v941 = vadd.f32 0.0, %v940
    %v942 = vpop.f32.mrb[0].mxu0
    %v943 = vpop.f32.mrb[0].mxu0
    %v944 = vadd.f32 0.0, %v943
    %v945 = vpop.f32.mrb[0].mxu0
    %946 = vmatprep.mubr.bf16.mxu0 0
    %947 = vmatmul.mubr.bf16.gmra.mrb[0].mxu0 %v835
    %v948 = vpop.f32.mrb[0].mxu0
    %v949 = vadd.f32 0.0, %v948
    %v950 = vpop.f32.mrb[0].mxu0
    %v951 = vpop.f32.mrb[0].mxu0
    %v952 = vadd.f32 0.0, %v951
    %v953 = vpop.f32.mrb[0].mxu0
    %954 = vmatprep.mubr.bf16.mxu0 0
    %955 = vmatmul.mubr.bf16.gmra.mrb[0].mxu0 %v836
    %v956 = vpop.f32.mrb[0].mxu0
    %v957 = vadd.f32 0.0, %v956
    %v958 = vpop.f32.mrb[0].mxu0
    %v959 = vpop.f32.mrb[0].mxu0
    %v960 = vadd.f32 0.0, %v959
    %v961 = vpop.f32.mrb[0].mxu0
    %962 = vmatprep.mubr.bf16.mxu0 0
    %963 = vmatmul.mubr.bf16.gmra.mrb[0].mxu0 %v837
    %v964 = vpop.f32.mrb[0].mxu0
    %v965 = vadd.f32 0.0, %v964
    %v966 = vpop.f32.mrb[0].mxu0
    %v967 = vpop.f32.mrb[0].mxu0
    %v968 = vadd.f32 0.0, %v967
    %v969 = vpop.f32.mrb[0].mxu0
    %970 = vmatprep.mubr.bf16.mxu0 0
    %971 = vmatmul.mubr.bf16.gmra.mrb[0].mxu0 %v838
    %v972 = vpop.f32.mrb[0].mxu0
    %v973 = vadd.f32 0.0, %v972
    %v974 = vpop.f32.mrb[0].mxu0
    %v975 = vpop.f32.mrb[0].mxu0
    %v976 = vadd.f32 0.0, %v975
    %v977 = vpop.f32.mrb[0].mxu0
    %978 = vmatprep.mubr.bf16.mxu0 0
    %979 = vmatmul.mubr.bf16.gmra.mrb[0].mxu0 %v839
    %v980 = vpop.f32.mrb[0].mxu0
    %v981 = vadd.f32 0.0, %v980
    %v982 = vpop.f32.mrb[0].mxu0
    %v983 = vpop.f32.mrb[0].mxu0
    %v984 = vadd.f32 0.0, %v983
    %v985 = vpop.f32.mrb[0].mxu0
    %986 = vmatprep.mubr.bf16.mxu0 0
    %987 = vmatmul.mubr.bf16.gmra.mrb[0].mxu0 %v840
    %v988 = vpop.f32.mrb[0].mxu0
    %v989 = vadd.f32 0.0, %v988
    %v990 = vpop.f32.mrb[0].mxu0
    %v991 = vpop.f32.mrb[0].mxu0
    %v992 = vadd.f32 0.0, %v991
    %v993 = vpop.f32.mrb[0].mxu0
    %994 = vmatprep.mubr.bf16.mxu0 0
    %995 = vmatmul.mubr.bf16.gmra.mrb[0].mxu0 %v841
    %v996 = vpop.f32.mrb[0].mxu0
    %v997 = vadd.f32 0.0, %v996
    %v998 = vpop.f32.mrb[0].mxu0
    %v999 = vpop.f32.mrb[0].mxu0
    %v1000 = vadd.f32 0.0, %v999
    %v1001 = vpop.f32.mrb[0].mxu0
    %1002 = vdwg.mxu0
    %v1003 = vsel %vm482, %v944, -inf
    %v1004 = vmax.f32 %v941, %v1003
    %v1005 = vrot.slane %v1004, 4
    %v1006 = vmax.f32 %v1004, %v1005
    %v1007 = vrot.slane %v1006, 2
    %v1008 = vmax.f32 %v1006, %v1007
    %v1009 = vrot.slane %v1008, 1
    %v1010 = vmax.f32 %v1008, %v1009
    %v1011 = vsel %vm482, %v952, -inf
    %v1012 = vmax.f32 %v949, %v1011
    %v1013 = vrot.slane %v1012, 4
    %v1014 = vmax.f32 %v1012, %v1013
    %v1015 = vrot.slane %v1014, 2
    %v1016 = vmax.f32 %v1014, %v1015
    %v1017 = vrot.slane %v1016, 1
    %v1018 = vmax.f32 %v1016, %v1017
    %v1019 = vsel %vm482, %v960, -inf
    %v1020 = vmax.f32 %v957, %v1019
    %v1021 = vrot.slane %v1020, 4
    %v1022 = vmax.f32 %v1020, %v1021
    %v1023 = vrot.slane %v1022, 2
    %v1024 = vmax.f32 %v1022, %v1023
    %v1025 = vrot.slane %v1024, 1
    %v1026 = vmax.f32 %v1024, %v1025
    %v1027 = vsel %vm482, %v968, -inf
    %v1028 = vmax.f32 %v965, %v1027
    %v1029 = vrot.slane %v1028, 4
    %v1030 = vmax.f32 %v1028, %v1029
    %v1031 = vrot.slane %v1030, 2
    %v1032 = vmax.f32 %v1030, %v1031
    %v1033 = vrot.slane %v1032, 1
    %v1034 = vmax.f32 %v1032, %v1033
    %v1035 = vsel %vm482, %v976, -inf
    %v1036 = vmax.f32 %v973, %v1035
    %v1037 = vrot.slane %v1036, 4
    %v1038 = vmax.f32 %v1036, %v1037
    %v1039 = vrot.slane %v1038, 2
    %v1040 = vmax.f32 %v1038, %v1039
    %v1041 = vrot.slane %v1040, 1
    %v1042 = vmax.f32 %v1040, %v1041
    %v1043 = vsel %vm482, %v984, -inf
    %v1044 = vmax.f32 %v981, %v1043
    %v1045 = vrot.slane %v1044, 4
    %v1046 = vmax.f32 %v1044, %v1045
    %v1047 = vrot.slane %v1046, 2
    %v1048 = vmax.f32 %v1046, %v1047
    %v1049 = vrot.slane %v1048, 1
    %v1050 = vmax.f32 %v1048, %v1049
    %v1051 = vsel %vm482, %v992, -inf
    %v1052 = vmax.f32 %v989, %v1051
    %v1053 = vrot.slane %v1052, 4
    %v1054 = vmax.f32 %v1052, %v1053
    %v1055 = vrot.slane %v1054, 2
    %v1056 = vmax.f32 %v1054, %v1055
    %v1057 = vrot.slane %v1056, 1
    %v1058 = vmax.f32 %v1056, %v1057
    %v1059 = vsel %vm482, %v1000, -inf
    %v1060 = vmax.f32 %v997, %v1059
    %v1061 = vrot.slane %v1060, 4
    %v1062 = vmax.f32 %v1060, %v1061
    %v1063 = vrot.slane %v1062, 2
    %v1064 = vmax.f32 %v1062, %v1063
    %v1065 = vrot.slane %v1064, 1
    %v1066 = vmax.f32 %v1064, %v1065
    %v1067 = vld [vmem:[#allocation7] sm:$0x1]
    %v1069 = vlaneseq
    %v1070 = vshrl.u32 %v1069, 7
    %v1071 = vsub.s32 0, %v1070
    %v1072 = vrot.slane %v1067, %v1071
    %v1074 = vadd.f32 %v1010, %v1072
    %v1075 = vadd.f32 %v1018, %v1072
    %v1076 = vadd.f32 %v1026, %v1072
    %v1077 = vadd.f32 %v1034, %v1072
    %v1078 = vadd.f32 %v1042, %v1072
    %v1079 = vadd.f32 %v1050, %v1072
    %v1080 = vadd.f32 %v1058, %v1072
    %v1081 = vadd.f32 %v1066, %v1072
    %v1082 = vmax.f32 %v1074, 0.0
    %v1083 = vmax.f32 %v1075, 0.0
    %v1084 = vmax.f32 %v1076, 0.0
    %v1085 = vmax.f32 %v1077, 0.0
    %v1086 = vmax.f32 %v1078, 0.0
    %v1087 = vmax.f32 %v1079, 0.0
    %v1088 = vmax.f32 %v1080, 0.0
    %v1089 = vmax.f32 %v1081, 0.0
    %v1098 = vrot.slane %v1083, 7
    %vm1099 = vcmask 1041409
    %v1100 = vsel %vm1099, %v1098, %v1082
    %v1101 = vrot.slane %v1084, 6
    %vm1102 = vcmask 1042434
    %v1103 = vsel %vm1102, %v1101, %v1100
    %v1104 = vrot.slane %v1085, 5
    %vm1105 = vcmask 1043459
    %v1106 = vsel %vm1105, %v1104, %v1103
    %v1107 = vrot.slane %v1086, 4
    %vm1108 = vcmask 1044484
    %v1109 = vsel %vm1108, %v1107, %v1106
    %v1110 = vrot.slane %v1087, 3
    %vm1111 = vcmask 1045509
    %v1112 = vsel %vm1111, %v1110, %v1109
    %v1113 = vrot.slane %v1088, 2
    %vm1114 = vcmask 1046534
    %v1115 = vsel %vm1114, %v1113, %v1112
    %v1116 = vrot.slane %v1089, 1
    %vm1117 = vcmask 1047559
    %v1118 = vsel %vm1117, %v1116, %v1115
    %1120 = vst [vmem:[#allocation8] sm:$0xff] %v1118
    // Predicated region
    $region26: #{cnn_forward.1} parent=1 // pred_check
      _
    $region27: #{cnn_forward.1} parent=1 // pred_check_branch
      %1122 = sbr.rel (0) target = $region29
    $region28: #{cnn_forward.1} parent=1 // pred_region
      %s1124 = ssub.s32 128, 128
      %1125 = vsyncadd [#allocation4], %s1124
      %s1127 = sshll.u32 [#allocation8], 4
      %s1128 = int_to_ptr.vmem [resolvable:$true] %s1127
      %1130 = dma.vmem_to_hbm [thread:$0]  %s1128, 128, %s3, [#allocation4]
    $region29: #{cnn_forward.1} parent=1 // pred_fallthru
      _
    // Predicated region
    $region30: #{cnn_forward.1} parent=1 // pred_check
      _
    $region31: #{cnn_forward.1} parent=1 // pred_check_branch
      %1132 = sbr.rel (0) target = $region33
    $region32: #{cnn_forward.1} parent=1 // pred_region
      %1133 = dma.done [#allocation4], 128
    $region33: #{cnn_forward.1} parent=1 // pred_fallthru
      _
    %1134 = vsyncpa [#allocation3], 1
    %1135 = vsyncpa [#allocation6], 1
    %1136 = vsyncpa [#allocation4], 1

</llo_original>
